<compile_context>
chip_gen: v5e
topology: v5e:2x2
jax: 0.10.0
libtpu: 0.0.40
codegen_flags: <defaults>
</compile_context>

<pallas_src>
import functools

import jax
import jax.numpy as jnp
from jax.experimental import pallas as pl
from jax.experimental.pallas import tpu as pltpu


def _round_up(x, m):
    return ((x + m - 1) // m) * m


def _add_labels_kernel(pat_ref, expand_ref, coords_ref, feat_ref, out_ref, *, L, D):
    # pat_ref:    VMEM [L, pack*D]        int32  (lane-replicated labels, constant block)
    # expand_ref: VMEM [pack*D, pack*Cw]  f32    (grouping/expansion matrix, constant block)
    # coords_ref: VMEM [tile_p, pack*D]   int32
    # feat_ref:   VMEM [tile_p, pack*Cw]  (native feature dtype)
    # out_ref:    VMEM [tile_p, pack*Cw]
    coords = coords_ref[...]                                   # [tile_p, pack*D]
    expand = expand_ref[...]                                   # [pack*D, pack*Cw]

    match = None
    for l in range(L):                                         # L is small & static
        pat = pat_ref[pl.ds(l, 1), :]                          # [1, pack*D]
        eq = (coords == pat).astype(jnp.float32)               # pure VPU compare
        # Count matching coordinate components per original row, already expanded
        # to the packed feature geometry — free work on the otherwise idle MXU.
        cnt = jnp.dot(eq, expand, preferred_element_type=jnp.float32)
        m_l = cnt >= jnp.float32(D)                            # all D components equal
        match = m_l if match is None else (match | m_l)

    out_ref[...] = jnp.where(match, 1.0, feat_ref[...]).astype(out_ref.dtype)


def add_labels(features, coords, labels, *, max_tile_p=4096):
    """features: [N, C] float, coords: [N, D] i32, labels: [L, D] i32 -> [N, C] float."""
    features = jnp.asarray(features)          # keep native dtype (f32 / bf16 / ...)
    coords = jnp.asarray(coords, jnp.int32)
    labels = jnp.asarray(labels, jnp.int32)

    N, C = features.shape
    D = coords.shape[1]
    L = labels.shape[0]

    if L == 0:
        # No labels: output is just (a view of) the features.
        return features

    # Choose packing so the kernel's last dim is always lane-dense (multiple of 128).
    if C % 128 == 0:
        pack, Cw = 1, C
    elif 128 % C == 0:
        pack, Cw = 128 // C, C
    else:
        pack, Cw = 1, _round_up(C, 128)       # pad channels instead of lane-sparse stores
    width = pack * Cw

    # Pad only to a multiple of `pack` (often nothing) — never to a tile multiple.
    N_pad = _round_up(N, pack)
    feat_p = features
    if Cw != C:
        feat_p = jnp.pad(feat_p, ((0, 0), (0, Cw - C)))
    if N_pad != N:
        feat_p = jnp.pad(feat_p, ((0, N_pad - N), (0, 0)))
        coords_p = jnp.pad(coords, ((0, N_pad - N), (0, 0)))
    else:
        coords_p = coords
    NP = N_pad // pack

    feat_packed = feat_p.reshape(NP, width)                 # free contiguous reshape
    coords_packed = coords_p.reshape(NP, pack * D)          # free contiguous reshape
    label_pat = jnp.tile(labels, (1, pack))                 # [L, pack*D], tiny

    # Constant grouping / expansion matrix: G[i, j] = 1 iff i//D == j//Cw.
    gi = jax.lax.broadcasted_iota(jnp.int32, (pack * D, width), 0) // D
    gj = jax.lax.broadcasted_iota(jnp.int32, (pack * D, width), 1) // Cw
    expand = (gi == gj).astype(jnp.float32)

    # Tile size: as large as allowed while the double-buffered working set
    # (feat + out + lane-padded coords) stays comfortably inside scoped VMEM.
    bytes_per_row = (2 * width * feat_packed.dtype.itemsize
                     + _round_up(pack * D, 128) * 4)
    cap_rows = max(8, (((20 << 20) // (2 * bytes_per_row)) // 8) * 8)
    tile_p = min(max_tile_p, cap_rows, _round_up(NP, 8))
    grid = (pl.cdiv(NP, tile_p),)                           # ragged boundary block OK

    kernel = functools.partial(_add_labels_kernel, L=L, D=D)

    out_packed = pl.pallas_call(
        kernel,
        out_shape=jax.ShapeDtypeStruct((NP, width), feat_packed.dtype),
        grid=grid,
        in_specs=[
            pl.BlockSpec((L, pack * D), lambda i: (0, 0)),       # label patterns (const)
            pl.BlockSpec((pack * D, width), lambda i: (0, 0)),   # expansion matrix (const)
            pl.BlockSpec((tile_p, pack * D), lambda i: (i, 0)),  # packed coords
            pl.BlockSpec((tile_p, width), lambda i: (i, 0)),     # packed features
        ],
        out_specs=pl.BlockSpec((tile_p, width), lambda i: (i, 0)),
        input_output_aliases={3: 0},   # reuse the feature buffer for the output
        compiler_params=pltpu.CompilerParams(
            dimension_semantics=("parallel",),
            vmem_limit_bytes=32 * 1024 * 1024,
        ),
    )(label_pat, expand, coords_packed, feat_packed)

    out = out_packed.reshape(N_pad, Cw)
    if N_pad != N:
        out = out[:N]
    if Cw != C:
        out = out[:, :C]
    return out


def add_labels_ref(features, coords, labels):
    # Pure-JAX reference for correctness checking.
    eq = coords[:, None, :] == labels[None, :, :]           # [N, L, D]
    mask = jnp.any(jnp.all(eq, axis=-1), axis=-1)           # [N]
    return jnp.where(mask[:, None], 1.0, features)


if __name__ == "__main__":
    key = jax.random.PRNGKey(0)
    k_feat, k_coord = jax.random.split(key)

    # Small shapes consistent with a sparse tensor: N points, C channels,
    # D = 1 batch index + 3 spatial coords, L label coordinates.
    N, C, D, L = 100, 8, 4, 2          # N deliberately NOT a multiple of the packing

    features = jax.random.normal(k_feat, (N, C), dtype=jnp.float32)
    coords = jax.random.randint(k_coord, (N, D), 0, 8, dtype=jnp.int32)
    # pick labels so that at least some rows match (take two existing coords)
    labels = jnp.stack([coords[3], coords[17]], axis=0).astype(jnp.int32)

    out = jax.jit(add_labels)(features, coords, labels)
    out = jax.block_until_ready(out)

    ref = add_labels_ref(features, coords, labels)
    assert out.shape == ref.shape, "shape mismatch"
    assert out.dtype == features.dtype, "dtype not preserved"
    assert jnp.allclose(out, ref), "Pallas output mismatch vs reference"

    print("KERNEL_OK")
</pallas_src>

<mosaic_0001>
module attributes {stable_mosaic.version = 11 : i64} {
  func.func @_add_labels_kernel(%arg0: i32, %arg1: memref<2x64xi32, #tpu.memory_space<vmem>>, %arg2: memref<64x128xf32, #tpu.memory_space<vmem>>, %arg3: memref<8x64xi32, #tpu.memory_space<vmem>>, %arg4: memref<8x128xf32, #tpu.memory_space<vmem>>, %arg5: memref<8x128xf32, #tpu.memory_space<vmem>>) attributes {dimension_semantics = [#tpu.dimension_semantics<parallel>], iteration_bounds = array<i64: 1>, scalar_prefetch = 0 : i64, scratch_operands = 0 : i64, tpu.core_type = #tpu.core_type<tc>, window_params = [{pipeline_mode = #tpu.pipeline_mode<synchronous>, transform_indices = @transform_0, window_bounds = array<i64: 2, 64>}, {pipeline_mode = #tpu.pipeline_mode<synchronous>, transform_indices = @transform_1, window_bounds = array<i64: 64, 128>}, {transform_indices = @transform_2, window_bounds = array<i64: 8, 64>}, {transform_indices = @transform_3, window_bounds = array<i64: 8, 128>}, {transform_indices = @transform_4, window_bounds = array<i64: 8, 128>}]} {
    %c0 = arith.constant 0 : index
    %c0_0 = arith.constant 0 : index
    %0 = vector.load %arg3[%c0, %c0_0] : memref<8x64xi32, #tpu.memory_space<vmem>>, vector<8x64xi32>
    %c0_1 = arith.constant 0 : index
    %c0_2 = arith.constant 0 : index
    %1 = vector.load %arg2[%c0_1, %c0_2] : memref<64x128xf32, #tpu.memory_space<vmem>>, vector<64x128xf32>
    %c0_3 = arith.constant 0 : index
    %c0_4 = arith.constant 0 : index
    %2 = vector.load %arg1[%c0_3, %c0_4] : memref<2x64xi32, #tpu.memory_space<vmem>>, vector<1x64xi32>
    %3 = vector.broadcast %2 : vector<1x64xi32> to vector<8x64xi32>
    %4 = arith.cmpi eq, %0, %3 : vector<8x64xi32>
    %5 = arith.extui %4 : vector<8x64xi1> to vector<8x64xi32>
    %6 = arith.sitofp %5 : vector<8x64xi32> to vector<8x64xf32>
    %cst = arith.constant dense<0.000000e+00> : vector<8x128xf32>
    %7 = tpu.matmul %6, %1, %cst {dimension_numbers = #tpu.dot_dimension_numbers<[1], [0], [0], [1], [0, 0, 1, 1], [], []>} : vector<8x64xf32>, vector<64x128xf32>, vector<8x128xf32> -> vector<8x128xf32>
    %cst_5 = arith.constant 4.000000e+00 : f32
    %8 = vector.broadcast %cst_5 : f32 to vector<8x128xf32>
    %9 = arith.cmpf oge, %7, %8 : vector<8x128xf32>
    %c1 = arith.constant 1 : index
    %c0_6 = arith.constant 0 : index
    %10 = vector.load %arg1[%c1, %c0_6] : memref<2x64xi32, #tpu.memory_space<vmem>>, vector<1x64xi32>
    %11 = vector.broadcast %10 : vector<1x64xi32> to vector<8x64xi32>
    %12 = arith.cmpi eq, %0, %11 : vector<8x64xi32>
    %13 = arith.extui %12 : vector<8x64xi1> to vector<8x64xi32>
    %14 = arith.sitofp %13 : vector<8x64xi32> to vector<8x64xf32>
    %cst_7 = arith.constant dense<0.000000e+00> : vector<8x128xf32>
    %15 = tpu.matmul %14, %1, %cst_7 {dimension_numbers = #tpu.dot_dimension_numbers<[1], [0], [0], [1], [0, 0, 1, 1], [], []>} : vector<8x64xf32>, vector<64x128xf32>, vector<8x128xf32> -> vector<8x128xf32>
    %cst_8 = arith.constant 4.000000e+00 : f32
    %16 = vector.broadcast %cst_8 : f32 to vector<8x128xf32>
    %17 = arith.cmpf oge, %15, %16 : vector<8x128xf32>
    %18 = arith.ori %9, %17 : vector<8x128xi1>
    %c0_9 = arith.constant 0 : index
    %c0_10 = arith.constant 0 : index
    %19 = vector.load %arg4[%c0_9, %c0_10] : memref<8x128xf32, #tpu.memory_space<vmem>>, vector<8x128xf32>
    %cst_11 = arith.constant 1.000000e+00 : f32
    %20 = vector.broadcast %cst_11 : f32 to vector<8x128xf32>
    %21 = arith.select %18, %20, %19 : vector<8x128xi1>, vector<8x128xf32>
    %c0_12 = arith.constant 0 : index
    %c0_13 = arith.constant 0 : index
    %22 = vector.load %arg5[%c0_12, %c0_13] : memref<8x128xf32, #tpu.memory_space<vmem>>, vector<8x128xf32>
    tpu.vector_store %arg5[%c0_12, %c0_13], %21 {strides = array<i32>} : memref<8x128xf32, #tpu.memory_space<vmem>>, vector<8x128xf32>,
    return
  }
  func.func @transform_0(%arg0: i32) -> (i32, i32) {
    %c0_i32 = arith.constant 0 : i32
    %c0_i32_0 = arith.constant 0 : i32
    %c0_i32_1 = arith.constant 0 : i32
    return %c0_i32, %c0_i32_0 : i32, i32
  }
  func.func @transform_1(%arg0: i32) -> (i32, i32) {
    %c0_i32 = arith.constant 0 : i32
    %c0_i32_0 = arith.constant 0 : i32
    %c0_i32_1 = arith.constant 0 : i32
    return %c0_i32, %c0_i32_0 : i32, i32
  }
  func.func @transform_2(%arg0: i32) -> (i32, i32) {
    %c0_i32 = arith.constant 0 : i32
    %c0_i32_0 = arith.constant 0 : i32
    return %arg0, %c0_i32 : i32, i32
  }
  func.func @transform_3(%arg0: i32) -> (i32, i32) {
    %c0_i32 = arith.constant 0 : i32
    %c0_i32_0 = arith.constant 0 : i32
    return %arg0, %c0_i32 : i32, i32
  }
  func.func @transform_4(%arg0: i32) -> (i32, i32) {
    %c0_i32 = arith.constant 0 : i32
    %c0_i32_0 = arith.constant 0 : i32
    return %arg0, %c0_i32 : i32, i32
  }
}

</mosaic_0001>

<llo_original>
// kernel: tile.9
$region0: #{tile.9}
  %s0 = inlined_call_operand.vmem [shape: s32[2,16,4], index: 0, kind: input, shape index: {}]
  %s1 = inlined_call_operand.vmem [shape: s32[2,64], index: 1, kind: output, shape index: {}]
  $region1: #{tile.9} parent=0
    #allocation0 [shape = 'u8[4096]{0}', space=vmem, size = 0x1000, scoped, tag = 'scoped mem for output reshape']
    %s2 = smov 3
    %v3 = vld [vmem:[%s0] ss:$16 sm:%s2]
    %vm4 = vcmask 31744
    %5 = vst.msk [vmem:[#allocation0] sm:$0x3] %vm4, %v3
    %s6 = scalar_lea.vmem %s0, 15
    %s7 = smov 3
    %v8 = vld [vmem:[%s6] ss:$16 sm:%s7]
    %9 = vrot.lane.b32.xlu0 %v8, 60
    %v10 = vpop.permute.xlu0 %9
    %vm11 = vcmask 523744
    %12 = vst.msk [vmem:[#allocation0] sm:$0x3] %vm11, %v10
    %s13 = scalar_lea.vmem %s0, 14
    %s14 = smov 3
    %v15 = vld [vmem:[%s13] ss:$16 sm:%s14]
    %16 = vrot.lane.b32.xlu0 %v15, 56
    %v17 = vpop.permute.xlu0 %16
    %vm18 = vcmask 490944
    %19 = vst.msk [vmem:[#allocation0] sm:$0x3] %vm18, %v17
    %s20 = scalar_lea.vmem %s0, 13
    %s21 = smov 3
    %v22 = vld [vmem:[%s20] ss:$16 sm:%s21]
    %23 = vrot.lane.b32.xlu0 %v22, 52
    %v24 = vpop.permute.xlu0 %23
    %vm25 = vcmask 458144
    %26 = vst.msk [vmem:[#allocation0] sm:$0x3] %vm25, %v24
    %s27 = scalar_lea.vmem %s0, 12
    %s28 = smov 3
    %v29 = vld [vmem:[%s27] ss:$16 sm:%s28]
    %30 = vrot.lane.b32.xlu0 %v29, 48
    %v31 = vpop.permute.xlu0 %30
    %vm32 = vcmask 425344
    %33 = vst.msk [vmem:[#allocation0] sm:$0x3] %vm32, %v31
    %s34 = scalar_lea.vmem %s0, 11
    %s35 = smov 3
    %v36 = vld [vmem:[%s34] ss:$16 sm:%s35]
    %37 = vrot.lane.b32.xlu0 %v36, 44
    %v38 = vpop.permute.xlu0 %37
    %vm39 = vcmask 392544
    %40 = vst.msk [vmem:[#allocation0] sm:$0x3] %vm39, %v38
    %s41 = scalar_lea.vmem %s0, 10
    %s42 = smov 3
    %v43 = vld [vmem:[%s41] ss:$16 sm:%s42]
    %44 = vrot.lane.b32.xlu0 %v43, 40
    %v45 = vpop.permute.xlu0 %44
    %vm46 = vcmask 359744
    %47 = vst.msk [vmem:[#allocation0] sm:$0x3] %vm46, %v45
    %s48 = scalar_lea.vmem %s0, 9
    %s49 = smov 3
    %v50 = vld [vmem:[%s48] ss:$16 sm:%s49]
    %51 = vrot.lane.b32.xlu0 %v50, 36
    %v52 = vpop.permute.xlu0 %51
    %vm53 = vcmask 326944
    %54 = vst.msk [vmem:[#allocation0] sm:$0x3] %vm53, %v52
    %s55 = scalar_lea.vmem %s0, 8
    %s56 = smov 3
    %v57 = vld [vmem:[%s55] ss:$16 sm:%s56]
    %58 = vrot.lane.b32.xlu0 %v57, 32
    %v59 = vpop.permute.xlu0 %58
    %vm60 = vcmask 294144
    %61 = vst.msk [vmem:[#allocation0] sm:$0x3] %vm60, %v59
    %s62 = scalar_lea.vmem %s0, 7
    %s63 = smov 3
    %v64 = vld [vmem:[%s62] ss:$16 sm:%s63]
    %65 = vrot.lane.b32.xlu0 %v64, 28
    %v66 = vpop.permute.xlu0 %65
    %vm67 = vcmask 261344
    %68 = vst.msk [vmem:[#allocation0] sm:$0x3] %vm67, %v66
    %s69 = scalar_lea.vmem %s0, 6
    %s70 = smov 3
    %v71 = vld [vmem:[%s69] ss:$16 sm:%s70]
    %72 = vrot.lane.b32.xlu0 %v71, 24
    %v73 = vpop.permute.xlu0 %72
    %vm74 = vcmask 228544
    %75 = vst.msk [vmem:[#allocation0] sm:$0x3] %vm74, %v73
    %s76 = scalar_lea.vmem %s0, 5
    %s77 = smov 3
    %v78 = vld [vmem:[%s76] ss:$16 sm:%s77]
    %79 = vrot.lane.b32.xlu0 %v78, 20
    %v80 = vpop.permute.xlu0 %79
    %vm81 = vcmask 195744
    %82 = vst.msk [vmem:[#allocation0] sm:$0x3] %vm81, %v80
    %s83 = scalar_lea.vmem %s0, 4
    %s84 = smov 3
    %v85 = vld [vmem:[%s83] ss:$16 sm:%s84]
    %86 = vrot.lane.b32.xlu0 %v85, 16
    %v87 = vpop.permute.xlu0 %86
    %vm88 = vcmask 162944
    %89 = vst.msk [vmem:[#allocation0] sm:$0x3] %vm88, %v87
    %s90 = scalar_lea.vmem %s0, 3
    %s91 = smov 3
    %v92 = vld [vmem:[%s90] ss:$16 sm:%s91]
    %93 = vrot.lane.b32.xlu0 %v92, 12
    %v94 = vpop.permute.xlu0 %93
    %vm95 = vcmask 130144
    %96 = vst.msk [vmem:[#allocation0] sm:$0x3] %vm95, %v94
    %s97 = scalar_lea.vmem %s0, 2
    %s98 = smov 3
    %v99 = vld [vmem:[%s97] ss:$16 sm:%s98]
    %100 = vrot.lane.b32.xlu0 %v99, 8
    %v101 = vpop.permute.xlu0 %100
    %vm102 = vcmask 97344
    %103 = vst.msk [vmem:[#allocation0] sm:$0x3] %vm102, %v101
    %s104 = scalar_lea.vmem %s0, 1
    %s105 = smov 3
    %v106 = vld [vmem:[%s104] ss:$16 sm:%s105]
    %107 = vrot.lane.b32.xlu0 %v106, 4
    %v108 = vpop.permute.xlu0 %107
    %vm109 = vcmask 64544
    %110 = vst.msk [vmem:[#allocation0] sm:$0x3] %vm109, %v108
    %s112 = ssub.s32 4, 1
    %v113 = vld [vmem:[#allocation0] sm:%s112]
    %s115 = ssub.s32 4, 1
    %116 = vst [vmem:[%s1] sm:%s115] %v113

</llo_original>
